<compile_context>
chip_gen: v6e
topology: v6e:2x2x1
jax: 0.10.0
libtpu: 0.0.40
codegen_flags: <defaults>
</compile_context>

<pallas_src>
import jax
import jax.numpy as jnp
from jax.experimental import pallas as pl
from jax.experimental.pallas import tpu as pltpu


def _ae_kernel(x_ref, w1_ref, b1_ref, w2_ref, b2_ref, o_ref):
    # In-kernel bf16 cast of the streamed x tile (free VPU work, no extra HBM pass).
    x = x_ref[...].astype(jnp.bfloat16)
    # encoder: [tb, 256](bf16) @ [256, d](bf16) -> f32 accum, then f32 bias+tanh (EUP)
    h = jnp.dot(x, w1_ref[...], preferred_element_type=jnp.float32)
    h = jnp.tanh(h + b1_ref[...])
    # decoder: [tb, d](bf16) @ [d, 256](bf16) -> f32 accum, then f32 bias
    y = jnp.dot(h.astype(jnp.bfloat16), w2_ref[...],
                preferred_element_type=jnp.float32)
    o_ref[...] = (y + b2_ref[...]).astype(o_ref.dtype)


def _round_up(n, m):
    return ((n + m - 1) // m) * m


def autoencoder_forward(x, w1, b1, w2, b2, *, tb=2048, out_dtype=jnp.bfloat16):
    """x: [B, 256]; w1: [256, d]; b1: [d]; w2: [d, 256]; b2: [256].

    Weights are stored pre-transposed as [in, out] so the kernel does x @ W,
    matching nn.Linear(in, out) semantics. Returns [B, 256] in `out_dtype`
    (bf16 by default to halve output HBM traffic; pass jnp.float32 if the
    consumer needs full precision).
    """
    B, in_dim = x.shape
    d = w1.shape[1]
    assert in_dim == 256 and w2.shape == (d, 256)

    # Batch tile: multiple of 16 (bf16 sublane packing), no larger than the
    # (16-aligned) batch. No padding of x: partial last block handled by Pallas.
    tb = max(16, min(_round_up(tb, 16), _round_up(B, 16)))
    steps = pl.cdiv(B, tb)
    # Keep >=2 grid steps when the batch allows, so both v7x TensorCores get work.
    if steps < 2 and B > 16:
        tb = max(16, _round_up(pl.cdiv(B, 2), 16))
        steps = pl.cdiv(B, tb)

    # Resident operands: one-time tiny casts (256*d elements), biases stay f32.
    w1_bf = w1.astype(jnp.bfloat16)
    w2_bf = w2.astype(jnp.bfloat16)
    b1_2d = b1.reshape(1, d).astype(jnp.float32)
    b2_2d = b2.reshape(1, 256).astype(jnp.float32)

    out_itemsize = jnp.dtype(out_dtype).itemsize
    cost = pl.CostEstimate(
        flops=4 * B * 256 * d,                       # two B x 256 x d matmuls
        transcendentals=B * d,                       # tanh
        bytes_accessed=(x.size * x.dtype.itemsize    # x stream in
                        + B * 256 * out_itemsize     # output stream
                        + (w1_bf.size + w2_bf.size) * 2
                        + (b1_2d.size + b2_2d.size) * 4),
    )

    out = pl.pallas_call(
        _ae_kernel,
        out_shape=jax.ShapeDtypeStruct((B, 256), out_dtype),
        grid_spec=pltpu.PrefetchScalarGridSpec(
            num_scalar_prefetch=0,
            grid=(steps,),
            in_specs=[
                pl.BlockSpec((tb, 256), lambda i: (i, 0)),   # x tile (streams, native dtype)
                pl.BlockSpec((256, d), lambda i: (0, 0)),    # encoder weight (resident)
                pl.BlockSpec((1, d), lambda i: (0, 0)),      # encoder bias (resident)
                pl.BlockSpec((d, 256), lambda i: (0, 0)),    # decoder weight (resident)
                pl.BlockSpec((1, 256), lambda i: (0, 0)),    # decoder bias (resident)
            ],
            out_specs=pl.BlockSpec((tb, 256), lambda i: (i, 0)),  # lane-dense output
        ),
        compiler_params=pltpu.CompilerParams(
            dimension_semantics=("parallel",),   # batch axis shards across TCs
            vmem_limit_bytes=48 << 20,           # ~6-13 MiB working set at tb=2048-4096
        ),
        cost_estimate=cost,
    )(x, w1_bf, b1_2d, w2_bf, b2_2d)

    return out


if __name__ == "__main__":
    key = jax.random.PRNGKey(0)
    B = 24       # small batch, deliberately NOT a multiple of the tile
    D_IN = 256   # fixed by the module
    D_HID = 32   # d_ (bottleneck dim)

    kx, k1, kb1, k2, kb2 = jax.random.split(key, 5)
    # Deterministic param init, matching nn.Linear's uniform(-1/sqrt(fan_in), +).
    lim1 = 1.0 / jnp.sqrt(jnp.float32(D_IN))
    lim2 = 1.0 / jnp.sqrt(jnp.float32(D_HID))
    # Store weights pre-transposed as [in, out] for x @ W.
    w1 = jax.random.uniform(k1, (D_IN, D_HID), jnp.float32, -lim1, lim1)
    b1 = jax.random.uniform(kb1, (D_HID,), jnp.float32, -lim1, lim1)
    w2 = jax.random.uniform(k2, (D_HID, D_IN), jnp.float32, -lim2, lim2)
    b2 = jax.random.uniform(kb2, (D_IN,), jnp.float32, -lim2, lim2)

    x = jax.random.normal(kx, (B, D_IN), jnp.float32)

    # tb=16 at this toy size exercises the multi-step grid AND the partial
    # (ragged) last block; production default is tb=2048.
    out = autoencoder_forward(x, w1, b1, w2, b2, tb=16)
    out = jax.block_until_ready(out)

    # Reference check in plain JAX (same semantics as the PyTorch forward,
    # computed in f32). bf16 streaming + bf16 output loosen the tolerance.
    ref = jnp.tanh(x @ w1 + b1) @ w2 + b2
    assert out.shape == (B, D_IN)
    assert jnp.allclose(out.astype(jnp.float32), ref, atol=3e-2, rtol=3e-2), float(
        jnp.max(jnp.abs(out.astype(jnp.float32) - ref)))

    print("KERNEL_OK")
</pallas_src>

<mosaic_0001>
module attributes {stable_mosaic.version = 11 : i64} {
  func.func @_ae_kernel(%arg0: i32, %arg1: memref<16x256xf32, #tpu.memory_space<vmem>>, %arg2: memref<256x32xbf16, #tpu.memory_space<vmem>>, %arg3: memref<1x32xf32, #tpu.memory_space<vmem>>, %arg4: memref<32x256xbf16, #tpu.memory_space<vmem>>, %arg5: memref<1x256xf32, #tpu.memory_space<vmem>>, %arg6: memref<16x256xbf16, #tpu.memory_space<vmem>>) attributes {dimension_semantics = [#tpu.dimension_semantics<parallel>], iteration_bounds = array<i64: 2>, scalar_prefetch = 0 : i64, scratch_operands = 0 : i64, tpu.core_type = #tpu.core_type<tc>, window_params = [{transform_indices = @transform_0, window_bounds = array<i64: 16, 256>}, {pipeline_mode = #tpu.pipeline_mode<synchronous>, transform_indices = @transform_1, window_bounds = array<i64: 256, 32>}, {pipeline_mode = #tpu.pipeline_mode<synchronous>, transform_indices = @transform_2, window_bounds = array<i64: 1, 32>}, {pipeline_mode = #tpu.pipeline_mode<synchronous>, transform_indices = @transform_3, window_bounds = array<i64: 32, 256>}, {pipeline_mode = #tpu.pipeline_mode<synchronous>, transform_indices = @transform_4, window_bounds = array<i64: 1, 256>}, {transform_indices = @transform_5, window_bounds = array<i64: 16, 256>}]} {
    %c0 = arith.constant 0 : index
    %c0_0 = arith.constant 0 : index
    %0 = vector.load %arg1[%c0, %c0_0] : memref<16x256xf32, #tpu.memory_space<vmem>>, vector<16x256xf32>
    %1 = arith.truncf %0 : vector<16x256xf32> to vector<16x256xbf16>
    %c0_1 = arith.constant 0 : index
    %c0_2 = arith.constant 0 : index
    %2 = vector.load %arg2[%c0_1, %c0_2] : memref<256x32xbf16, #tpu.memory_space<vmem>>, vector<256x32xbf16>
    %cst = arith.constant dense<0.000000e+00> : vector<16x32xf32>
    %3 = tpu.matmul %1, %2, %cst {dimension_numbers = #tpu.dot_dimension_numbers<[1], [0], [0], [1], [0, 0, 1, 1], [], []>} : vector<16x256xbf16>, vector<256x32xbf16>, vector<16x32xf32> -> vector<16x32xf32>
    %c0_3 = arith.constant 0 : index
    %c0_4 = arith.constant 0 : index
    %4 = vector.load %arg3[%c0_3, %c0_4] : memref<1x32xf32, #tpu.memory_space<vmem>>, vector<1x32xf32>
    %5 = vector.broadcast %4 : vector<1x32xf32> to vector<16x32xf32>
    %6 = arith.addf %3, %5 : vector<16x32xf32>
    %7 = math.tanh %6 : vector<16x32xf32>
    %8 = arith.truncf %7 : vector<16x32xf32> to vector<16x32xbf16>
    %c0_5 = arith.constant 0 : index
    %c0_6 = arith.constant 0 : index
    %9 = vector.load %arg4[%c0_5, %c0_6] : memref<32x256xbf16, #tpu.memory_space<vmem>>, vector<32x256xbf16>
    %cst_7 = arith.constant dense<0.000000e+00> : vector<16x256xf32>
    %10 = tpu.matmul %8, %9, %cst_7 {dimension_numbers = #tpu.dot_dimension_numbers<[1], [0], [0], [1], [0, 0, 1, 1], [], []>} : vector<16x32xbf16>, vector<32x256xbf16>, vector<16x256xf32> -> vector<16x256xf32>
    %c0_8 = arith.constant 0 : index
    %c0_9 = arith.constant 0 : index
    %11 = vector.load %arg5[%c0_8, %c0_9] : memref<1x256xf32, #tpu.memory_space<vmem>>, vector<1x256xf32>
    %12 = vector.broadcast %11 : vector<1x256xf32> to vector<16x256xf32>
    %13 = arith.addf %10, %12 : vector<16x256xf32>
    %14 = arith.truncf %13 : vector<16x256xf32> to vector<16x256xbf16>
    %c0_10 = arith.constant 0 : index
    %c0_11 = arith.constant 0 : index
    %15 = vector.load %arg6[%c0_10, %c0_11] : memref<16x256xbf16, #tpu.memory_space<vmem>>, vector<16x256xbf16>
    tpu.vector_store %arg6[%c0_10, %c0_11], %14 {strides = array<i32>} : memref<16x256xbf16, #tpu.memory_space<vmem>>, vector<16x256xbf16>,
    return
  }
  func.func @transform_0(%arg0: i32) -> (i32, i32) {
    %c0_i32 = arith.constant 0 : i32
    %c0_i32_0 = arith.constant 0 : i32
    return %arg0, %c0_i32 : i32, i32
  }
  func.func @transform_1(%arg0: i32) -> (i32, i32) {
    %c0_i32 = arith.constant 0 : i32
    %c0_i32_0 = arith.constant 0 : i32
    %c0_i32_1 = arith.constant 0 : i32
    return %c0_i32, %c0_i32_0 : i32, i32
  }
  func.func @transform_2(%arg0: i32) -> (i32, i32) {
    %c0_i32 = arith.constant 0 : i32
    %c0_i32_0 = arith.constant 0 : i32
    %c0_i32_1 = arith.constant 0 : i32
    return %c0_i32, %c0_i32_0 : i32, i32
  }
  func.func @transform_3(%arg0: i32) -> (i32, i32) {
    %c0_i32 = arith.constant 0 : i32
    %c0_i32_0 = arith.constant 0 : i32
    %c0_i32_1 = arith.constant 0 : i32
    return %c0_i32, %c0_i32_0 : i32, i32
  }
  func.func @transform_4(%arg0: i32) -> (i32, i32) {
    %c0_i32 = arith.constant 0 : i32
    %c0_i32_0 = arith.constant 0 : i32
    %c0_i32_1 = arith.constant 0 : i32
    return %c0_i32, %c0_i32_0 : i32, i32
  }
  func.func @transform_5(%arg0: i32) -> (i32, i32) {
    %c0_i32 = arith.constant 0 : i32
    %c0_i32_0 = arith.constant 0 : i32
    return %arg0, %c0_i32 : i32, i32
  }
}

</mosaic_0001>

<llo_original>
// kernel: tpu_custom_call.1
$region0: #{tpu_custom_call.1}
  #allocation0 [shape = 'u32[]', space=smem, size = 0x4, offset = 0x4, fixed_abs, tag = 'smem constant byte address 0x4 - core index']
  #allocation1 [shape = 'u32[144,128]{1,0:T(1,128)}', space=vmem, size = 0x12000, scoped, tag = 'internal scratch']
  %s0 = inlined_call_operand.vmem [shape: f32[24,256], index: 0, kind: input, shape index: {}]
  %s1 = inlined_call_operand.vmem [shape: bf16[256,32], index: 1, kind: input, shape index: {}]
  %s2 = inlined_call_operand.vmem [shape: f32[1,32], index: 2, kind: input, shape index: {}]
  %s3 = inlined_call_operand.vmem [shape: bf16[32,256], index: 3, kind: input, shape index: {}]
  %s4 = inlined_call_operand.vmem [shape: f32[1,256], index: 4, kind: input, shape index: {}]
  %s5 = inlined_call_operand.hbm [shape: bf16[24,256], index: 5, kind: output, shape index: {}]
  %s6 = sld [smem:[#allocation0]]
  $region53: #{tpu_custom_call.1} parent=0
    _
  %s8 = ssub.s32 1, %s6
  %s9 = scalar_select 0, %s8, %s6
  $region1: #{tpu_custom_call.1} parent=0
    #allocation2 [shape = 'u8[16384]{0}', space=vmem, size = 0x4000, scoped, tag = 'output window, operand 0']
    #allocation3 [shape = 's32[2]{0}', space=sflag, size = 0x8, scoped, tag = 'scoped memory for tpu_custom_call.1']
    %10 = vsyncpa [#allocation3], 0
    %s11 = scalar_lea.sflag [#allocation3], 1
    %12 = vsyncpa %s11, 0
    loop: start=0, step=1, limit=4
    $region2: #{tpu_custom_call.1} parent=1 // loop_pre_header
      _
    $region3: #{tpu_custom_call.1} parent=1 // loop_header
      %s14 = sphi 0, %s18
      %p15 = scmp.ge.s32.totalorder %s14, 4
      %s24 = sphi 0, %s26
      %s27 = sphi 0, %s24
      %s28 = sphi 0, %s27
      %s44 = sphi 0, %s28
      %s48 = sphi 0, %s48
      %s50 = sphi 0, %s48
      %s51 = sphi 0, %s50
      %s65 = sphi 0, %s51
      %s69 = sphi 0, %s69
      %s71 = sphi 0, %s69
      %s72 = sphi 0, %s71
      %s86 = sphi 0, %s72
      %s90 = sphi 0, %s90
      %s92 = sphi 0, %s90
      %s93 = sphi 0, %s92
      %s107 = sphi 0, %s93
      %s111 = sphi 0, %s111
      %s113 = sphi 0, %s111
      %s114 = sphi 0, %s113
      %s128 = sphi 0, %s114
      %s134 = sphi 0, %s136
      %s137 = sphi 0, %s134
      %s138 = sphi 0, %s137
      %s154 = sphi 0, %s138
    $region4: #{tpu_custom_call.1} parent=1 // loop_header_branch
      %17 = sbr.rel (%p15) target = $region8
    $region5: #{tpu_custom_call.1} parent=1 // loop_body
      %s19 = ssub.s32 %s14, 1
      %s20 = ssub.s32 %s14, 2
      %s21 = sadd.s32 %s14, 1
      %s22 = ssub.s32 %s14, %s21
      %p23 = scmp.eq.s32.totalorder %s22, 0
      %s25 = sadd.s32 %s24, 1
      %s26 = scalar_select %p23, %s24, %s25
      %p29 = pneg %p23
      %p30 = scmp.eq.s32.totalorder %s14, 1
      %p31 = por %p29, %p30
      %p32 = scmp.ne.s32.totalorder %s24, %s27
      %p33 = scmp.eq.s32.totalorder %s14, 0
      %p34 = por %p32, %p33
      %p35 = scmp.ne.s32.totalorder %s24, %s27
      %p36 = scmp.eq.s32.totalorder %s19, 1
      %p37 = por %p35, %p36
      %p38 = scmp.ne.s32.totalorder %s27, %s28
      %p39 = scmp.eq.s32.totalorder %s19, 0
      %p40 = por %p38, %p39
      %p41 = scmp.ne.s32.totalorder %s27, %s28
      %p42 = scmp.eq.s32.totalorder %s20, 1
      %p43 = por %p41, %p42
      %p45 = scmp.ne.s32.totalorder %s28, %s44
      %p46 = scmp.eq.s32.totalorder %s20, 0
      %p47 = por %p45, %p46
      %s49 = sadd.s32 %s48, 1
      %p52 = scmp.eq.s32.totalorder %s14, 1
      %p53 = scmp.ne.s32.totalorder %s48, %s50
      %p54 = scmp.eq.s32.totalorder %s14, 0
      %p55 = por %p53, %p54
      %p56 = scmp.ne.s32.totalorder %s48, %s50
      %p57 = scmp.eq.s32.totalorder %s19, 1
      %p58 = por %p56, %p57
      %p59 = scmp.ne.s32.totalorder %s50, %s51
      %p60 = scmp.eq.s32.totalorder %s19, 0
      %p61 = por %p59, %p60
      %p62 = scmp.ne.s32.totalorder %s50, %s51
      %p63 = scmp.eq.s32.totalorder %s20, 1
      %p64 = por %p62, %p63
      %p66 = scmp.ne.s32.totalorder %s51, %s65
      %p67 = scmp.eq.s32.totalorder %s20, 0
      %p68 = por %p66, %p67
      %s70 = sadd.s32 %s69, 1
      %p73 = scmp.eq.s32.totalorder %s14, 1
      %p74 = scmp.ne.s32.totalorder %s69, %s71
      %p75 = scmp.eq.s32.totalorder %s14, 0
      %p76 = por %p74, %p75
      %p77 = scmp.ne.s32.totalorder %s69, %s71
      %p78 = scmp.eq.s32.totalorder %s19, 1
      %p79 = por %p77, %p78
      %p80 = scmp.ne.s32.totalorder %s71, %s72
      %p81 = scmp.eq.s32.totalorder %s19, 0
      %p82 = por %p80, %p81
      %p83 = scmp.ne.s32.totalorder %s71, %s72
      %p84 = scmp.eq.s32.totalorder %s20, 1
      %p85 = por %p83, %p84
      %p87 = scmp.ne.s32.totalorder %s72, %s86
      %p88 = scmp.eq.s32.totalorder %s20, 0
      %p89 = por %p87, %p88
      %s91 = sadd.s32 %s90, 1
      %p94 = scmp.eq.s32.totalorder %s14, 1
      %p95 = scmp.ne.s32.totalorder %s90, %s92
      %p96 = scmp.eq.s32.totalorder %s14, 0
      %p97 = por %p95, %p96
      %p98 = scmp.ne.s32.totalorder %s90, %s92
      %p99 = scmp.eq.s32.totalorder %s19, 1
      %p100 = por %p98, %p99
      %p101 = scmp.ne.s32.totalorder %s92, %s93
      %p102 = scmp.eq.s32.totalorder %s19, 0
      %p103 = por %p101, %p102
      %p104 = scmp.ne.s32.totalorder %s92, %s93
      %p105 = scmp.eq.s32.totalorder %s20, 1
      %p106 = por %p104, %p105
      %p108 = scmp.ne.s32.totalorder %s93, %s107
      %p109 = scmp.eq.s32.totalorder %s20, 0
      %p110 = por %p108, %p109
      %s112 = sadd.s32 %s111, 1
      %p115 = scmp.eq.s32.totalorder %s14, 1
      %p116 = scmp.ne.s32.totalorder %s111, %s113
      %p117 = scmp.eq.s32.totalorder %s14, 0
      %p118 = por %p116, %p117
      %p119 = scmp.ne.s32.totalorder %s111, %s113
      %p120 = scmp.eq.s32.totalorder %s19, 1
      %p121 = por %p119, %p120
      %p122 = scmp.ne.s32.totalorder %s113, %s114
      %p123 = scmp.eq.s32.totalorder %s19, 0
      %p124 = por %p122, %p123
      %p125 = scmp.ne.s32.totalorder %s113, %s114
      %p126 = scmp.eq.s32.totalorder %s20, 1
      %p127 = por %p125, %p126
      %p129 = scmp.ne.s32.totalorder %s114, %s128
      %p130 = scmp.eq.s32.totalorder %s20, 0
      %p131 = por %p129, %p130
      %s132 = ssub.s32 %s14, %s21
      %p133 = scmp.eq.s32.totalorder %s132, 0
      %s135 = sadd.s32 %s134, 1
      %s136 = scalar_select %p133, %s134, %s135
      %p139 = pneg %p133
      %p140 = scmp.eq.s32.totalorder %s14, 1
      %p141 = por %p139, %p140
      %p142 = scmp.ne.s32.totalorder %s134, %s137
      %p143 = scmp.eq.s32.totalorder %s14, 0
      %p144 = por %p142, %p143
      %p145 = scmp.ne.s32.totalorder %s134, %s137
      %p146 = scmp.eq.s32.totalorder %s19, 1
      %p147 = por %p145, %p146
      %p148 = scmp.ne.s32.totalorder %s137, %s138
      %p149 = scmp.eq.s32.totalorder %s19, 0
      %p150 = por %p148, %p149
      %p151 = scmp.ne.s32.totalorder %s137, %s138
      %p152 = scmp.eq.s32.totalorder %s20, 1
      %p153 = por %p151, %p152
      %p155 = scmp.ne.s32.totalorder %s138, %s154
      %p156 = scmp.eq.s32.totalorder %s20, 0
      %p157 = por %p155, %p156
      %p158 = scmp.le.s32.totalorder 1, %s14
      %p159 = scmp.lt.s32.totalorder %s14, 3
      %p160 = pnand %p158, %p159
      %p161 = pneg %p160
      // Predicated region
      $region9: #{tpu_custom_call.1} parent=5 // pred_check
        _
      $region10: #{tpu_custom_call.1} parent=5 // pred_check_branch
        %163 = sbr.rel (%p160) target = $region12
      $region11: #{tpu_custom_call.1} parent=5 // pred_region
        %s164 = ssub.s32 %s14, 1
        // Predicated region
        $region13: #{tpu_custom_call.1} parent=11 // pred_check
          %p165 = pneg %p61
        $region14: #{tpu_custom_call.1} parent=11 // pred_check_branch
          %167 = sbr.rel (%p165) target = $region16
        $region15: #{tpu_custom_call.1} parent=11 // pred_region
          _
        $region16: #{tpu_custom_call.1} parent=11 // pred_fallthru
          _
        // Predicated region
        $region17: #{tpu_custom_call.1} parent=11 // pred_check
          %p168 = pneg %p82
        $region18: #{tpu_custom_call.1} parent=11 // pred_check_branch
          %170 = sbr.rel (%p168) target = $region20
        $region19: #{tpu_custom_call.1} parent=11 // pred_region
          _
        $region20: #{tpu_custom_call.1} parent=11 // pred_fallthru
          _
        // Predicated region
        $region21: #{tpu_custom_call.1} parent=11 // pred_check
          %p171 = pneg %p103
        $region22: #{tpu_custom_call.1} parent=11 // pred_check_branch
          %173 = sbr.rel (%p171) target = $region24
        $region23: #{tpu_custom_call.1} parent=11 // pred_region
          _
        $region24: #{tpu_custom_call.1} parent=11 // pred_fallthru
          _
        // Predicated region
        $region25: #{tpu_custom_call.1} parent=11 // pred_check
          %p174 = pneg %p124
        $region26: #{tpu_custom_call.1} parent=11 // pred_check_branch
          %176 = sbr.rel (%p174) target = $region28
        $region27: #{tpu_custom_call.1} parent=11 // pred_region
          _
        $region28: #{tpu_custom_call.1} parent=11 // pred_fallthru
          _
      $region12: #{tpu_custom_call.1} parent=5 // pred_fallthru
        _
      %p177 = scmp.lt.s32.totalorder %s14, 2
      // Predicated region
      $region29: #{tpu_custom_call.1} parent=5 // pred_check
        %p178 = pneg %p177
      $region30: #{tpu_custom_call.1} parent=5 // pred_check_branch
        %180 = sbr.rel (%p178) target = $region32
      $region31: #{tpu_custom_call.1} parent=5 // pred_region
        // Predicated region
        $region33: #{tpu_custom_call.1} parent=31 // pred_check
          %p181 = pneg %p34
        $region34: #{tpu_custom_call.1} parent=31 // pred_check_branch
          %183 = sbr.rel (%p181) target = $region36
        $region35: #{tpu_custom_call.1} parent=31 // pred_region
          %s184 = smul.u32 2, %s14
          %s185 = ssub.s32 3, %s184
          %p186 = scmp.lt.s32.totalorder %s185, 2
          %s187 = scalar_select %p186, %s185, 2
          %s188 = smul.u32 128, %s187
          %s189 = smul.u32 %s188, 2
          %p190 = scmp.lt.s32.totalorder %s184, 2
          %s191 = scalar_select %p190, %s184, 2
          %s192 = smul.addr %s191, 2
          %s193 = smul.addr %s192, 8
          %s194 = scalar_lea.vmem %s0, %s193
          %s195 = smul.u32 2, %s14
          %s196 = ssub.s32 3, %s195
          %p197 = scmp.lt.s32.totalorder %s196, 2
          %s198 = scalar_select %p197, %s196, 2
          %s199 = smul.u32 128, %s198
          %s200 = smul.u32 %s199, 2
        $region36: #{tpu_custom_call.1} parent=31 // pred_fallthru
          _
      $region32: #{tpu_custom_call.1} parent=5 // pred_fallthru
        _
      %p201 = scmp.le.s32.totalorder 1, %s14
      %p202 = scmp.lt.s32.totalorder %s14, 3
      %p203 = pnand %p201, %p202
      %p204 = pneg %p203
      // Predicated region
      $region37: #{tpu_custom_call.1} parent=5 // pred_check
        _
      $region38: #{tpu_custom_call.1} parent=5 // pred_check_branch
        %206 = sbr.rel (%p203) target = $region40
      $region39: #{tpu_custom_call.1} parent=5 // pred_region
        %s207 = ssub.s32 %s14, 1
        %s208 = smul.u32 2, %s19
        %s209 = ssub.s32 3, %s208
        %p210 = scmp.lt.s32.totalorder %s209, 2
        %s211 = scalar_select %p210, %s209, 2
        %s212 = smul.u32 128, %s211
        %s213 = smul.u32 %s212, 2
        %p214 = scmp.lt.s32.totalorder %s208, 2
        %s215 = scalar_select %p214, %s208, 2
        %s216 = smul.addr %s215, 2
        %s217 = smul.addr %s216, 8
        %s218 = scalar_lea.vmem %s0, %s217
        %p219 = pneg %p40
        %p220 = pneg %p37
        %p221 = pneg %p61
        %p222 = pneg %p58
        %p223 = pneg %p82
        %p224 = pneg %p79
        %p225 = pneg %p103
        %p226 = pneg %p100
        %p227 = pneg %p124
        %p228 = pneg %p121
        %p229 = pneg %p150
        %p230 = pneg %p147
        %s231 = sand.u32 %s137, 1
        %s232 = scalar_lea.sflag [#allocation3], %s231
        %s233 = sand.u32 %s137, 1
        %s234 = smul.addr %s233, 16
        %s235 = scalar_lea.vmem [#allocation2], %s234
        %s236 = smul.u32 2, %s19
        %s237 = ssub.s32 3, %s236
        %p238 = scmp.lt.s32.totalorder %s237, 2
        %s239 = scalar_select %p238, %s237, 2
        %s240 = smul.u32 128, %s239
        %s241 = smul.u32 %s240, 2
        %p242 = scmp.lt.s32.totalorder %s236, 2
        %s243 = scalar_select %p242, %s236, 2
        %s244 = smul.addr %s243, 2
        %s245 = smul.addr %s244, 8
        %s246 = scalar_lea.vmem %s0, %s245
        %s247 = smul.u32 2, %s19
        %s248 = ssub.s32 3, %s247
        %p249 = scmp.lt.s32.totalorder %s248, 2
        %s250 = scalar_select %p249, %s248, 2
        %s251 = smul.u32 128, %s250
        %s252 = smul.u32 %s251, 2
        %s253 = smul.u32 2, %s19
        %s254 = ssub.s32 3, %s253
        %p255 = scmp.lt.s32.totalorder %s254, 2
        %s256 = scalar_select %p255, %s254, 2
        %s257 = smul.u32 64, %s256
        %s258 = smul.u32 %s257, 2
        %v260 = vld [vmem:[%s246] sm:$0xff]
        %v261 = vld [vmem:[%s246 + $0x8] sm:$0xff]
        %v262 = vld [vmem:[%s246 + $0x10] sm:$0xff]
        %v263 = vld [vmem:[%s246 + $0x18] sm:$0xff]
        %v264 = vpack.c.bf16 %v262, %v260
        %v265 = vpack.c.bf16 %v263, %v261
        %v266 = vld [vmem:[%s1] sm:$0xf]
        %v267 = vld [vmem:[%s1 + $0x4] sm:$0xf]
        %v268 = vld [vmem:[%s1 + $0x8] sm:$0xf]
        %v269 = vld [vmem:[%s1 + $0xc] sm:$0xf]
        %v270 = vld [vmem:[%s1 + $0x10] sm:$0xf]
        %v271 = vld [vmem:[%s1 + $0x14] sm:$0xf]
        %v272 = vld [vmem:[%s1 + $0x18] sm:$0xf]
        %v273 = vld [vmem:[%s1 + $0x1c] sm:$0xf]
        %v274 = vld [vmem:[%s1 + $0x20] sm:$0xf]
        %v275 = vld [vmem:[%s1 + $0x24] sm:$0xf]
        %v276 = vld [vmem:[%s1 + $0x28] sm:$0xf]
        %v277 = vld [vmem:[%s1 + $0x2c] sm:$0xf]
        %v278 = vld [vmem:[%s1 + $0x30] sm:$0xf]
        %v279 = vld [vmem:[%s1 + $0x34] sm:$0xf]
        %v280 = vld [vmem:[%s1 + $0x38] sm:$0xf]
        %v281 = vld [vmem:[%s1 + $0x3c] sm:$0xf]
        %v282 = vld [vmem:[%s1 + $0x40] sm:$0xf]
        %v283 = vld [vmem:[%s1 + $0x44] sm:$0xf]
        %v284 = vld [vmem:[%s1 + $0x48] sm:$0xf]
        %v285 = vld [vmem:[%s1 + $0x4c] sm:$0xf]
        %v286 = vld [vmem:[%s1 + $0x50] sm:$0xf]
        %v287 = vld [vmem:[%s1 + $0x54] sm:$0xf]
        %v288 = vld [vmem:[%s1 + $0x58] sm:$0xf]
        %v289 = vld [vmem:[%s1 + $0x5c] sm:$0xf]
        %v290 = vld [vmem:[%s1 + $0x60] sm:$0xf]
        %v291 = vld [vmem:[%s1 + $0x64] sm:$0xf]
        %v292 = vld [vmem:[%s1 + $0x68] sm:$0xf]
        %v293 = vld [vmem:[%s1 + $0x6c] sm:$0xf]
        %v294 = vld [vmem:[%s1 + $0x70] sm:$0xf]
        %v295 = vld [vmem:[%s1 + $0x74] sm:$0xf]
        %v296 = vld [vmem:[%s1 + $0x78] sm:$0xf]
        %v297 = vld [vmem:[%s1 + $0x7c] sm:$0xf]
        %v298 = vld [vmem:[%s2] sm:$0x1]
        %v300 = vlaneseq
        %v301 = vshrl.u32 %v300, 7
        %v302 = vsub.s32 0, %v301
        %v303 = vrot.slane %v298, %v302
        %v337 = vunpack.c.l.b16 %v266
        %v338 = vunpack.c.l.b16 %v267
        %v339 = vunpack.c.l.b16 %v268
        %v340 = vunpack.c.l.b16 %v269
        %v341 = vunpack.c.l.b16 %v270
        %v342 = vunpack.c.l.b16 %v271
        %v343 = vunpack.c.l.b16 %v272
        %v344 = vunpack.c.l.b16 %v273
        %v345 = vunpack.c.l.b16 %v274
        %v346 = vunpack.c.l.b16 %v275
        %v347 = vunpack.c.l.b16 %v276
        %v348 = vunpack.c.l.b16 %v277
        %v349 = vunpack.c.l.b16 %v278
        %v350 = vunpack.c.l.b16 %v279
        %v351 = vunpack.c.l.b16 %v280
        %v352 = vunpack.c.l.b16 %v281
        %v353 = vunpack.c.l.b16 %v282
        %v354 = vunpack.c.l.b16 %v283
        %v355 = vunpack.c.l.b16 %v284
        %v356 = vunpack.c.l.b16 %v285
        %v357 = vunpack.c.l.b16 %v286
        %v358 = vunpack.c.l.b16 %v287
        %v359 = vunpack.c.l.b16 %v288
        %v360 = vunpack.c.l.b16 %v289
        %v361 = vunpack.c.l.b16 %v290
        %v362 = vunpack.c.l.b16 %v291
        %v363 = vunpack.c.l.b16 %v292
        %v364 = vunpack.c.l.b16 %v293
        %v365 = vunpack.c.l.b16 %v294
        %v366 = vunpack.c.l.b16 %v295
        %v367 = vunpack.c.l.b16 %v296
        %v368 = vunpack.c.l.b16 %v297
        %v369 = vpack.c.b16 %v338, %v337
        %v370 = vpack.c.b16 %v340, %v339
        %v371 = vpack.c.b16 %v342, %v341
        %v372 = vpack.c.b16 %v344, %v343
        %v373 = vpack.c.b16 %v346, %v345
        %v374 = vpack.c.b16 %v348, %v347
        %v375 = vpack.c.b16 %v350, %v349
        %v376 = vpack.c.b16 %v352, %v351
        %v377 = vpack.c.b16 %v354, %v353
        %v378 = vpack.c.b16 %v356, %v355
        %v379 = vpack.c.b16 %v358, %v357
        %v380 = vpack.c.b16 %v360, %v359
        %v381 = vpack.c.b16 %v362, %v361
        %v382 = vpack.c.b16 %v364, %v363
        %v383 = vpack.c.b16 %v366, %v365
        %v384 = vpack.c.b16 %v368, %v367
        %401 = vmatprep.subr.bf16.mxu0 0
        %402 = vmatpush1.bf16.msra.mxu0 %v376
        %403 = vmatprep.subr.bf16.mxu0 0
        %404 = vmatpush1.bf16.msra.mxu0 %v375
        %405 = vmatprep.subr.bf16.mxu0 0
        %406 = vmatpush1.bf16.msra.mxu0 %v374
        %407 = vmatprep.subr.bf16.mxu0 0
        %408 = vmatpush1.bf16.msra.mxu0 %v373
        %409 = vmatprep.subr.bf16.mxu0 0
        %410 = vmatpush1.bf16.msra.mxu0 %v372
        %411 = vmatprep.subr.bf16.mxu0 0
        %412 = vmatpush1.bf16.msra.mxu0 %v371
        %413 = vmatprep.subr.bf16.mxu0 0
        %414 = vmatpush1.bf16.msra.mxu0 %v370
        %415 = vmatprep.subr.bf16.mxu0 0
        %416 = vmatpush1.bf16.msra.mxu0 %v369
        %417 = vmatprep.subr.bf16.mxu0 0
        %418 = vmatpush2.bf16.msra.mxu0 %v384
        %419 = vmatprep.subr.bf16.mxu0 0
        %420 = vmatpush2.bf16.msra.mxu0 %v383
        %421 = vmatprep.subr.bf16.mxu0 0
        %422 = vmatpush2.bf16.msra.mxu0 %v382
        %423 = vmatprep.subr.bf16.mxu0 0
        %424 = vmatpush2.bf16.msra.mxu0 %v381
        %425 = vmatprep.subr.bf16.mxu0 0
        %426 = vmatpush2.bf16.msra.mxu0 %v380
        %427 = vmatprep.subr.bf16.mxu0 0
        %428 = vmatpush2.bf16.msra.mxu0 %v379
        %429 = vmatprep.subr.bf16.mxu0 0
        %430 = vmatpush2.bf16.msra.mxu0 %v378
        %431 = vmatprep.subr.bf16.mxu0 0
        %432 = vmatpush2.bf16.msra.mxu0 %v377
        %433 = vmatprep.mubr.bf16.mxu0 %v265
        %434 = vmatmul.mubr.bf16.gmra.mxu0 %v264
        %v435 = vpop.f32.mrf.mxu0
        %v436 = vadd.f32 %v303, %v435
        %v437 = vpop.f32.mrf.mxu0
        %v438 = vpop.f32.mrf.mxu0
        %v439 = vadd.f32 %v303, %v438
        %v440 = vpop.f32.mrf.mxu0
        %441 = vdwg.mxu0
        %v442 = vtanh.pop %v436
        %v443 = vtanh.pop %v439
        %v444 = vpack.c.bf16 %v443, %v442
        %v445 = vld [vmem:[%s3] sm:$0xff]
        %v446 = vld [vmem:[%s3 + $0x8] sm:$0xff]
        %v447 = vld [vmem:[%s3 + $0x10] sm:$0xff]
        %v448 = vld [vmem:[%s3 + $0x18] sm:$0xff]
        %v449 = vld [vmem:[%s4] sm:$0x3]
        %v451 = vlaneseq
        %v452 = vshrl.u32 %v451, 7
        %v453 = vsub.s32 0, %v452
        %v454 = vrot.slane %v449, %v453
        %v455 = vlaneseq
        %v456 = vshrl.u32 %v455, 7
        %v457 = vsub.s32 1, %v456
        %v458 = vrot.slane %v449, %v457
        %v465 = vunpack.c.l.b16 %v445
        %v466 = vunpack.c.h.b16 %v445
        %v467 = vunpack.c.l.b16 %v446
        %v468 = vunpack.c.h.b16 %v446
        %v469 = vunpack.c.l.b16 %v447
        %v470 = vunpack.c.h.b16 %v447
        %v471 = vunpack.c.l.b16 %v448
        %v472 = vunpack.c.h.b16 %v448
        %v473 = vpack.c.b16 %v467, %v465
        %v474 = vpack.c.b16 %v468, %v466
        %v475 = vpack.c.b16 %v471, %v469
        %v476 = vpack.c.b16 %v472, %v470
        %vm481 = vcmask 261120
        %v483 = vsel %vm481, %v444, 0
        %485 = vmatprep.subr.bf16.mxu0 0
        %486 = vmatpush1.bf16.msra.mxu0 0
        %487 = vmatprep.subr.bf16.mxu0 0
        %488 = vmatpush1.bf16.msra.mxu0 0
        %489 = vmatprep.subr.bf16.mxu0 0
        %490 = vmatpush1.bf16.msra.mxu0 0
        %491 = vmatprep.subr.bf16.mxu0 0
        %492 = vmatpush1.bf16.msra.mxu0 0
        %493 = vmatprep.subr.bf16.mxu0 0
        %494 = vmatpush1.bf16.msra.mxu0 0
        %495 = vmatprep.subr.bf16.mxu0 0
        %496 = vmatpush1.bf16.msra.mxu0 0
        %497 = vmatprep.subr.bf16.mxu0 %v476
        %498 = vmatpush1.bf16.msra.mxu0 %v475
        %499 = vmatprep.subr.bf16.mxu0 %v474
        %500 = vmatpush1.bf16.msra.mxu0 %v473
        %501 = vmatprep.subr.bf16.mxu0 0
        %502 = vmatpush2.bf16.msra.mxu0 0
        %503 = vmatprep.subr.bf16.mxu0 0
        %504 = vmatpush2.bf16.msra.mxu0 0
        %505 = vmatprep.subr.bf16.mxu0 0
        %506 = vmatpush2.bf16.msra.mxu0 0
        %507 = vmatprep.subr.bf16.mxu0 0
        %508 = vmatpush2.bf16.msra.mxu0 0
        %509 = vmatprep.subr.bf16.mxu0 0
        %510 = vmatpush2.bf16.msra.mxu0 0
        %511 = vmatprep.subr.bf16.mxu0 0
        %512 = vmatpush2.bf16.msra.mxu0 0
        %513 = vmatprep.subr.bf16.mxu0 0
        %514 = vmatpush2.bf16.msra.mxu0 0
        %515 = vmatprep.subr.bf16.mxu0 0
        %516 = vmatpush2.bf16.msra.mxu0 0
        %517 = vmatprep.mubr.bf16.mxu0 0
        %518 = vmatmul.mubr.bf16.gmra.mxu0 %v483
        %v519 = vpop.f32.mrf.mxu0
        %v520 = vadd.f32 %v454, %v519
        %v521 = vpop.f32.mrf.mxu0
        %v522 = vadd.f32 %v458, %v521
        %v523 = vpop.f32.mrf.mxu0
        %v524 = vadd.f32 %v454, %v523
        %v525 = vpop.f32.mrf.mxu0
        %v526 = vadd.f32 %v458, %v525
        %527 = vdwg.mxu0
        %v528 = vpack.c.bf16 %v524, %v520
        %v529 = vpack.c.bf16 %v526, %v522
        %v532 = vunpack.c.l.b16 %v528
        %v533 = vunpack.c.l.b16 %v529
        %v534 = vunpack.c.h.b16 %v528
        %v535 = vunpack.c.h.b16 %v529
        %v536 = vpack.c.b16 %v533, %v532
        %v537 = vpack.c.b16 %v535, %v534
        %540 = vst [vmem:[%s235] sm:$0xff] %v536
        %541 = vst [vmem:[%s235 + $0x8] sm:$0xff] %v537
        %s542 = sand.u32 %s137, 1
        %s543 = scalar_lea.sflag [#allocation3], %s542
        %s544 = sand.u32 %s137, 1
        %s545 = smul.addr %s544, 16
        %s546 = scalar_lea.vmem [#allocation2], %s545
        // Predicated region
        $region41: #{tpu_custom_call.1} parent=39 // pred_check
          %p547 = pneg %p147
        $region42: #{tpu_custom_call.1} parent=39 // pred_check_branch
          %549 = sbr.rel (%p547) target = $region44
        $region43: #{tpu_custom_call.1} parent=39 // pred_region
          %s550 = smul.u32 2, %s19
          %s551 = ssub.s32 3, %s550
          %p552 = scmp.lt.s32.totalorder %s551, 2
          %s553 = scalar_select %p552, %s551, 2
          %s554 = smul.u32 64, %s553
          %s555 = smul.u32 %s554, 2
          %s557 = ssub.s32 256, %s555
          %558 = vsyncadd %s543, %s557
          %p559 = scmp.ne.s32.totalorder 0, %s555
          %s560 = smul.addr %s550, 2
          %s561 = smul.addr %s560, 64
          %s562 = scalar_lea.hbm %s5, %s561
          %s563 = smul.u32 8, %s553
          %s564 = sshll.u32 %s546, 4
          %s565 = int_to_ptr.vmem [resolvable:$true] %s564
          %s566 = sshll.u32 %s563, 4
          %570 = dma.vmem_to_hbm [thread:$0]  (%p559), %s565, %s566, %s562, %s543, 128, 128, 8
        $region44: #{tpu_custom_call.1} parent=39 // pred_fallthru
          _
      $region40: #{tpu_custom_call.1} parent=5 // pred_fallthru
        _
      %p571 = scmp.le.s32.totalorder 2, %s14
      // Predicated region
      $region45: #{tpu_custom_call.1} parent=5 // pred_check
        %p572 = pneg %p571
      $region46: #{tpu_custom_call.1} parent=5 // pred_check_branch
        %574 = sbr.rel (%p572) target = $region48
      $region47: #{tpu_custom_call.1} parent=5 // pred_region
        %s575 = ssub.s32 %s14, 2
        // Predicated region
        $region49: #{tpu_custom_call.1} parent=47 // pred_check
          %p576 = pneg %p153
        $region50: #{tpu_custom_call.1} parent=47 // pred_check_branch
          %578 = sbr.rel (%p576) target = $region52
        $region51: #{tpu_custom_call.1} parent=47 // pred_region
          %s579 = sand.u32 %s138, 1
          %s580 = scalar_lea.sflag [#allocation3], %s579
          %s581 = sand.u32 %s138, 1
          %s582 = smul.addr %s581, 16
          %s583 = scalar_lea.vmem [#allocation2], %s582
          %584 = dma.done %s580, 256
        $region52: #{tpu_custom_call.1} parent=47 // pred_fallthru
          _
      $region48: #{tpu_custom_call.1} parent=5 // pred_fallthru
        _
    $region6: #{tpu_custom_call.1} parent=1 // loop_footer
      %s18 = sadd.s32 1, %s14
    $region7: #{tpu_custom_call.1} parent=1 // loop_footer_branch
      %13 = sbr.rel target = $region3
    $region8: #{tpu_custom_call.1} parent=1 // loop_exit
      _
    %585 = vsyncpa [#allocation3], 1
    %s586 = scalar_lea.sflag [#allocation3], 1
    %587 = vsyncpa %s586, 1

</llo_original>
